<compile_context>
chip_gen: v7x
topology: tpu7x:2x2x1
jax: 0.10.0
libtpu: 0.0.40
codegen_flags: <defaults>
</compile_context>

<pallas_src>
import functools

import jax
import jax.numpy as jnp
from jax.experimental import pallas as pl
from jax.experimental.pallas import tpu as pltpu


def _fused_gradient_loss_kernel(pred_ref, targ_ref, mask_ref,
                                loss_ref, msum_ref, *, scales):
    """One batch element per grid step; emits per-scale (loss_sum, mask_sum)."""
    pred = pred_ref[0].astype(jnp.float32)   # (H, W)
    targ = targ_ref[0].astype(jnp.float32)   # (H, W)
    mask = mask_ref[0].astype(jnp.float32)   # (H, W)
    H, W = pred.shape

    # diff is scale independent: diff_s[i, j] == diff[i*step, j*step].
    diff = mask * (pred - targ)

    # Index vectors for the ::step selection masks (tiny: (H,1) and (1,W)).
    row_ids = jax.lax.broadcasted_iota(jnp.int32, (H, 1), 0)
    col_ids = jax.lax.broadcasted_iota(jnp.int32, (1, W), 1)

    for s in range(scales):
        step = 1 << s

        if step == 1:
            msel = mask
        else:
            # 0/1 selection of the rows / cols kept by [::step] (step is 2^s).
            rsel = ((row_ids & (step - 1)) == 0).astype(jnp.float32)  # (H, 1)
            csel = ((col_ids & (step - 1)) == 0).astype(jnp.float32)  # (1, W)
            msel = mask * rsel * csel                                 # (H, W)

        # sum(mask[::step, ::step]) for this batch element.
        msum_s = jnp.sum(msel)

        # Masked gradients.  msel[r,c]*msel[r,c+step] is nonzero only when both
        # (r,c) and (r,c+step) are subsample points, and then it equals
        # mask_s[r/step, c/step] * mask_s[r/step, c/step + 1] exactly — so the
        # sums reproduce the subsampled grad_x / grad_y sums of the reference.
        loss_s = jnp.float32(0.0)
        if step < W:
            gx = jnp.abs(diff[:, step:] - diff[:, :-step])
            gx = gx * (msel[:, :-step] * msel[:, step:])
            loss_s = loss_s + jnp.sum(gx)
        if step < H:
            gy = jnp.abs(diff[step:, :] - diff[:-step, :])
            gy = gy * (msel[:-step, :] * msel[step:, :])
            loss_s = loss_s + jnp.sum(gy)

        loss_ref[0:1, 0:1, s:s + 1] = jnp.reshape(loss_s, (1, 1, 1))
        msum_ref[0:1, 0:1, s:s + 1] = jnp.reshape(msum_s, (1, 1, 1))


def _gradient_loss_sums(prediction, target, mask, scales):
    """Returns per-batch, per-scale (loss_sum, mask_sum), each of shape (B, scales)."""
    B, H, W = prediction.shape
    kernel = functools.partial(_fused_gradient_loss_kernel, scales=scales)

    # VMEM sizing: 3 double-buffered input blocks + ~8 full-res f32 temporaries.
    itemsizes = [jnp.dtype(x.dtype).itemsize for x in (prediction, target, mask)]
    block_in_bytes = 2 * H * W * sum(itemsizes)
    work_bytes = 8 * H * W * 4
    needed = int(1.5 * (block_in_bytes + work_bytes)) + (1 << 20)
    vmem_limit = None if needed <= (16 << 20) else min(needed, 64 << 20)

    bytes_accessed = int(B * H * W * sum(itemsizes) + 2 * B * scales * 4)
    flops = int((2 + 10 * scales) * B * H * W)

    loss_sums, mask_sums = pl.pallas_call(
        kernel,
        out_shape=(
            jax.ShapeDtypeStruct((B, 1, scales), jnp.float32),
            jax.ShapeDtypeStruct((B, 1, scales), jnp.float32),
        ),
        grid_spec=pltpu.PrefetchScalarGridSpec(
            num_scalar_prefetch=0,
            grid=(B,),
            in_specs=[
                pl.BlockSpec((1, H, W), lambda b: (b, 0, 0)),
                pl.BlockSpec((1, H, W), lambda b: (b, 0, 0)),
                pl.BlockSpec((1, H, W), lambda b: (b, 0, 0)),
            ],
            out_specs=(
                pl.BlockSpec((1, 1, scales), lambda b: (b, 0, 0)),
                pl.BlockSpec((1, 1, scales), lambda b: (b, 0, 0)),
            ),
        ),
        compiler_params=pltpu.CompilerParams(
            dimension_semantics=("parallel",),
            vmem_limit_bytes=vmem_limit,
        ),
        cost_estimate=pl.CostEstimate(
            flops=flops, transcendentals=0, bytes_accessed=bytes_accessed),
    )(prediction, target, mask)

    return loss_sums[:, 0, :], mask_sums[:, 0, :]


def gradient_loss_forward(prediction, target, mask, scales=4):
    """Equivalent of GradientLoss(scales, reduction='batch-based').forward."""
    loss_b, msum_b = _gradient_loss_sums(prediction, target, mask, scales)
    loss_per_scale = jnp.sum(loss_b, axis=0)   # (scales,)
    msum_per_scale = jnp.sum(msum_b, axis=0)   # (scales,)

    # reduction_batch_based: sum(image_loss)/sum(M), 0 if sum(M)==0.
    # Guarded denominator so this is also safe under jax.grad.
    is_zero = msum_per_scale == 0
    denom = jnp.where(is_zero, jnp.float32(1.0), msum_per_scale)
    per_scale = jnp.where(is_zero, jnp.float32(0.0), loss_per_scale / denom)
    return jnp.sum(per_scale)


def _reference_forward(prediction, target, mask, scales=4):
    """Pure-JAX reference mirroring the PyTorch code exactly."""
    prediction = prediction.astype(jnp.float32)
    target = target.astype(jnp.float32)
    mask = mask.astype(jnp.float32)

    def one_scale(pred, targ, msk):
        M = jnp.sum(msk, axis=(1, 2))
        diff = msk * (pred - targ)
        gx = jnp.abs(diff[:, :, 1:] - diff[:, :, :-1]) * (msk[:, :, 1:] * msk[:, :, :-1])
        gy = jnp.abs(diff[:, 1:, :] - diff[:, :-1, :]) * (msk[:, 1:, :] * msk[:, :-1, :])
        image_loss = jnp.sum(gx, axis=(1, 2)) + jnp.sum(gy, axis=(1, 2))
        div = jnp.sum(M)
        return jnp.where(div == 0, 0.0, jnp.sum(image_loss) / div)

    total = jnp.float32(0.0)
    for scale in range(scales):
        step = 2 ** scale
        total = total + one_scale(
            prediction[:, ::step, ::step],
            target[:, ::step, ::step],
            mask[:, ::step, ::step],
        )
    return total


if __name__ == "__main__":
    key = jax.random.PRNGKey(0)
    k1, k2, k3 = jax.random.split(key, 3)

    B, H, W = 2, 16, 16
    prediction = jax.random.normal(k1, (B, H, W), dtype=jnp.float32)
    target = jax.random.normal(k2, (B, H, W), dtype=jnp.float32)
    # Binary validity mask (float, as in typical depth-supervision usage).
    mask = (jax.random.uniform(k3, (B, H, W)) > 0.3).astype(jnp.float32)

    out = gradient_loss_forward(prediction, target, mask, scales=4)
    out = jax.block_until_ready(out)

    ref = jax.block_until_ready(_reference_forward(prediction, target, mask, scales=4))
    assert jnp.allclose(out, ref, rtol=1e-4, atol=1e-4), (out, ref)

    print("KERNEL_OK")
</pallas_src>

<mosaic_0001>
module attributes {stable_mosaic.version = 11 : i64} {
  func.func @_fused_gradient_loss_kernel(%arg0: i32, %arg1: memref<1x16x16xf32, #tpu.memory_space<vmem>>, %arg2: memref<1x16x16xf32, #tpu.memory_space<vmem>>, %arg3: memref<1x16x16xf32, #tpu.memory_space<vmem>>, %arg4: memref<1x1x4xf32, #tpu.memory_space<vmem>>, %arg5: memref<1x1x4xf32, #tpu.memory_space<vmem>>) attributes {dimension_semantics = [#tpu.dimension_semantics<parallel>], iteration_bounds = array<i64: 2>, scalar_prefetch = 0 : i64, scratch_operands = 0 : i64, tpu.core_type = #tpu.core_type<tc>, window_params = [{transform_indices = @transform_0, window_bounds = array<i64: 1, 16, 16>}, {transform_indices = @transform_1, window_bounds = array<i64: 1, 16, 16>}, {transform_indices = @transform_2, window_bounds = array<i64: 1, 16, 16>}, {transform_indices = @transform_3, window_bounds = array<i64: 1, 1, 4>}, {transform_indices = @transform_4, window_bounds = array<i64: 1, 1, 4>}]} {
    %c0 = arith.constant 0 : index
    %c0_0 = arith.constant 0 : index
    %c0_1 = arith.constant 0 : index
    %0 = vector.load %arg1[%c0, %c0_0, %c0_1] : memref<1x16x16xf32, #tpu.memory_space<vmem>>, vector<1x16x16xf32>
    %1 = vector.shape_cast %0 : vector<1x16x16xf32> to vector<16x16xf32>
    %c0_2 = arith.constant 0 : index
    %c0_3 = arith.constant 0 : index
    %c0_4 = arith.constant 0 : index
    %2 = vector.load %arg2[%c0_2, %c0_3, %c0_4] : memref<1x16x16xf32, #tpu.memory_space<vmem>>, vector<1x16x16xf32>
    %3 = vector.shape_cast %2 : vector<1x16x16xf32> to vector<16x16xf32>
    %c0_5 = arith.constant 0 : index
    %c0_6 = arith.constant 0 : index
    %c0_7 = arith.constant 0 : index
    %4 = vector.load %arg3[%c0_5, %c0_6, %c0_7] : memref<1x16x16xf32, #tpu.memory_space<vmem>>, vector<1x16x16xf32>
    %5 = vector.shape_cast %4 : vector<1x16x16xf32> to vector<16x16xf32>
    %6 = arith.subf %1, %3 : vector<16x16xf32>
    %7 = arith.mulf %5, %6 : vector<16x16xf32>
    %8 = tpu.iota {dimensions = array<i32: 0>} : vector<16x1xi32>
    %9 = tpu.iota {dimensions = array<i32: 1>} : vector<1x16xi32>
    %10 = vector.shape_cast %5 : vector<16x16xf32> to vector<1x16x16xf32>
    %cst = arith.constant dense<0.000000e+00> : vector<1xf32>
    %11 = vector.multi_reduction <add>, %10, %cst [1, 2] : vector<1x16x16xf32> to vector<1xf32>
    %12 = vector.shape_cast %11 : vector<1xf32> to vector<1x1x1xf32>
    %13 = vector.extract %12[0, 0, 0] : f32 from vector<1x1x1xf32>
    %14 = vector.extract_strided_slice %7 {offsets = [0, 1], sizes = [16, 15], strides = [1, 1]} : vector<16x16xf32> to vector<16x15xf32>
    %15 = vector.extract_strided_slice %7 {offsets = [0, 0], sizes = [16, 15], strides = [1, 1]} : vector<16x16xf32> to vector<16x15xf32>
    %16 = arith.subf %14, %15 : vector<16x15xf32>
    %17 = math.absf %16 : vector<16x15xf32>
    %18 = vector.extract_strided_slice %5 {offsets = [0, 0], sizes = [16, 15], strides = [1, 1]} : vector<16x16xf32> to vector<16x15xf32>
    %19 = vector.extract_strided_slice %5 {offsets = [0, 1], sizes = [16, 15], strides = [1, 1]} : vector<16x16xf32> to vector<16x15xf32>
    %20 = arith.mulf %18, %19 : vector<16x15xf32>
    %21 = arith.mulf %17, %20 : vector<16x15xf32>
    %22 = vector.shape_cast %21 : vector<16x15xf32> to vector<1x16x15xf32>
    %cst_8 = arith.constant dense<0.000000e+00> : vector<1xf32>
    %23 = vector.multi_reduction <add>, %22, %cst_8 [1, 2] : vector<1x16x15xf32> to vector<1xf32>
    %24 = vector.shape_cast %23 : vector<1xf32> to vector<1x1x1xf32>
    %25 = vector.extract %24[0, 0, 0] : f32 from vector<1x1x1xf32>
    %cst_9 = arith.constant 0.000000e+00 : f32
    %26 = arith.addf %cst_9, %25 : f32
    %27 = vector.extract_strided_slice %7 {offsets = [1, 0], sizes = [15, 16], strides = [1, 1]} : vector<16x16xf32> to vector<15x16xf32>
    %28 = vector.extract_strided_slice %7 {offsets = [0, 0], sizes = [15, 16], strides = [1, 1]} : vector<16x16xf32> to vector<15x16xf32>
    %29 = arith.subf %27, %28 : vector<15x16xf32>
    %30 = math.absf %29 : vector<15x16xf32>
    %31 = vector.extract_strided_slice %5 {offsets = [0, 0], sizes = [15, 16], strides = [1, 1]} : vector<16x16xf32> to vector<15x16xf32>
    %32 = vector.extract_strided_slice %5 {offsets = [1, 0], sizes = [15, 16], strides = [1, 1]} : vector<16x16xf32> to vector<15x16xf32>
    %33 = arith.mulf %31, %32 : vector<15x16xf32>
    %34 = arith.mulf %30, %33 : vector<15x16xf32>
    %35 = vector.shape_cast %34 : vector<15x16xf32> to vector<1x15x16xf32>
    %cst_10 = arith.constant dense<0.000000e+00> : vector<1xf32>
    %36 = vector.multi_reduction <add>, %35, %cst_10 [1, 2] : vector<1x15x16xf32> to vector<1xf32>
    %37 = vector.shape_cast %36 : vector<1xf32> to vector<1x1x1xf32>
    %38 = vector.extract %37[0, 0, 0] : f32 from vector<1x1x1xf32>
    %39 = arith.addf %26, %38 : f32
    %40 = vector.broadcast %39 : f32 to vector<1x1x1xf32>
    %c0_11 = arith.constant 0 : index
    %c0_12 = arith.constant 0 : index
    %c0_13 = arith.constant 0 : index
    %41 = vector.load %arg4[%c0_11, %c0_12, %c0_13] : memref<1x1x4xf32, #tpu.memory_space<vmem>>, vector<1x1x1xf32>
    tpu.vector_store %arg4[%c0_11, %c0_12, %c0_13], %40 {strides = array<i32>} : memref<1x1x4xf32, #tpu.memory_space<vmem>>, vector<1x1x1xf32>,
    %42 = vector.broadcast %13 : f32 to vector<1x1x1xf32>
    %c0_14 = arith.constant 0 : index
    %c0_15 = arith.constant 0 : index
    %c0_16 = arith.constant 0 : index
    %43 = vector.load %arg5[%c0_14, %c0_15, %c0_16] : memref<1x1x4xf32, #tpu.memory_space<vmem>>, vector<1x1x1xf32>
    tpu.vector_store %arg5[%c0_14, %c0_15, %c0_16], %42 {strides = array<i32>} : memref<1x1x4xf32, #tpu.memory_space<vmem>>, vector<1x1x1xf32>,
    %c1_i32 = arith.constant 1 : i32
    %44 = vector.broadcast %c1_i32 : i32 to vector<16x1xi32>
    %45 = arith.andi %8, %44 : vector<16x1xi32>
    %c0_i32 = arith.constant 0 : i32
    %46 = vector.broadcast %c0_i32 : i32 to vector<16x1xi32>
    %47 = arith.cmpi eq, %45, %46 : vector<16x1xi32>
    %48 = arith.extui %47 : vector<16x1xi1> to vector<16x1xi32>
    %49 = arith.sitofp %48 : vector<16x1xi32> to vector<16x1xf32>
    %c1_i32_17 = arith.constant 1 : i32
    %50 = vector.broadcast %c1_i32_17 : i32 to vector<1x16xi32>
    %51 = arith.andi %9, %50 : vector<1x16xi32>
    %c0_i32_18 = arith.constant 0 : i32
    %52 = vector.broadcast %c0_i32_18 : i32 to vector<1x16xi32>
    %53 = arith.cmpi eq, %51, %52 : vector<1x16xi32>
    %54 = arith.extui %53 : vector<1x16xi1> to vector<1x16xi32>
    %55 = arith.sitofp %54 : vector<1x16xi32> to vector<1x16xf32>
    %56 = vector.broadcast %49 : vector<16x1xf32> to vector<16x16xf32>
    %57 = arith.mulf %5, %56 : vector<16x16xf32>
    %58 = vector.broadcast %55 : vector<1x16xf32> to vector<16x16xf32>
    %59 = arith.mulf %57, %58 : vector<16x16xf32>
    %60 = vector.shape_cast %59 : vector<16x16xf32> to vector<1x16x16xf32>
    %cst_19 = arith.constant dense<0.000000e+00> : vector<1xf32>
    %61 = vector.multi_reduction <add>, %60, %cst_19 [1, 2] : vector<1x16x16xf32> to vector<1xf32>
    %62 = vector.shape_cast %61 : vector<1xf32> to vector<1x1x1xf32>
    %63 = vector.extract %62[0, 0, 0] : f32 from vector<1x1x1xf32>
    %64 = vector.extract_strided_slice %7 {offsets = [0, 2], sizes = [16, 14], strides = [1, 1]} : vector<16x16xf32> to vector<16x14xf32>
    %65 = vector.extract_strided_slice %7 {offsets = [0, 0], sizes = [16, 14], strides = [1, 1]} : vector<16x16xf32> to vector<16x14xf32>
    %66 = arith.subf %64, %65 : vector<16x14xf32>
    %67 = math.absf %66 : vector<16x14xf32>
    %68 = vector.extract_strided_slice %59 {offsets = [0, 0], sizes = [16, 14], strides = [1, 1]} : vector<16x16xf32> to vector<16x14xf32>
    %69 = vector.extract_strided_slice %59 {offsets = [0, 2], sizes = [16, 14], strides = [1, 1]} : vector<16x16xf32> to vector<16x14xf32>
    %70 = arith.mulf %68, %69 : vector<16x14xf32>
    %71 = arith.mulf %67, %70 : vector<16x14xf32>
    %72 = vector.shape_cast %71 : vector<16x14xf32> to vector<1x16x14xf32>
    %cst_20 = arith.constant dense<0.000000e+00> : vector<1xf32>
    %73 = vector.multi_reduction <add>, %72, %cst_20 [1, 2] : vector<1x16x14xf32> to vector<1xf32>
    %74 = vector.shape_cast %73 : vector<1xf32> to vector<1x1x1xf32>
    %75 = vector.extract %74[0, 0, 0] : f32 from vector<1x1x1xf32>
    %cst_21 = arith.constant 0.000000e+00 : f32
    %76 = arith.addf %cst_21, %75 : f32
    %77 = vector.extract_strided_slice %7 {offsets = [2, 0], sizes = [14, 16], strides = [1, 1]} : vector<16x16xf32> to vector<14x16xf32>
    %78 = vector.extract_strided_slice %7 {offsets = [0, 0], sizes = [14, 16], strides = [1, 1]} : vector<16x16xf32> to vector<14x16xf32>
    %79 = arith.subf %77, %78 : vector<14x16xf32>
    %80 = math.absf %79 : vector<14x16xf32>
    %81 = vector.extract_strided_slice %59 {offsets = [0, 0], sizes = [14, 16], strides = [1, 1]} : vector<16x16xf32> to vector<14x16xf32>
    %82 = vector.extract_strided_slice %59 {offsets = [2, 0], sizes = [14, 16], strides = [1, 1]} : vector<16x16xf32> to vector<14x16xf32>
    %83 = arith.mulf %81, %82 : vector<14x16xf32>
    %84 = arith.mulf %80, %83 : vector<14x16xf32>
    %85 = vector.shape_cast %84 : vector<14x16xf32> to vector<1x14x16xf32>
    %cst_22 = arith.constant dense<0.000000e+00> : vector<1xf32>
    %86 = vector.multi_reduction <add>, %85, %cst_22 [1, 2] : vector<1x14x16xf32> to vector<1xf32>
    %87 = vector.shape_cast %86 : vector<1xf32> to vector<1x1x1xf32>
    %88 = vector.extract %87[0, 0, 0] : f32 from vector<1x1x1xf32>
    %89 = arith.addf %76, %88 : f32
    %90 = vector.broadcast %89 : f32 to vector<1x1x1xf32>
    %c0_23 = arith.constant 0 : index
    %c0_24 = arith.constant 0 : index
    %c1 = arith.constant 1 : index
    %91 = vector.load %arg4[%c0_23, %c0_24, %c1] : memref<1x1x4xf32, #tpu.memory_space<vmem>>, vector<1x1x1xf32>
    tpu.vector_store %arg4[%c0_23, %c0_24, %c1], %90 {strides = array<i32>} : memref<1x1x4xf32, #tpu.memory_space<vmem>>, vector<1x1x1xf32>,
    %92 = vector.broadcast %63 : f32 to vector<1x1x1xf32>
    %c0_25 = arith.constant 0 : index
    %c0_26 = arith.constant 0 : index
    %c1_27 = arith.constant 1 : index
    %93 = vector.load %arg5[%c0_25, %c0_26, %c1_27] : memref<1x1x4xf32, #tpu.memory_space<vmem>>, vector<1x1x1xf32>
    tpu.vector_store %arg5[%c0_25, %c0_26, %c1_27], %92 {strides = array<i32>} : memref<1x1x4xf32, #tpu.memory_space<vmem>>, vector<1x1x1xf32>,
    %c3_i32 = arith.constant 3 : i32
    %94 = vector.broadcast %c3_i32 : i32 to vector<16x1xi32>
    %95 = arith.andi %8, %94 : vector<16x1xi32>
    %c0_i32_28 = arith.constant 0 : i32
    %96 = vector.broadcast %c0_i32_28 : i32 to vector<16x1xi32>
    %97 = arith.cmpi eq, %95, %96 : vector<16x1xi32>
    %98 = arith.extui %97 : vector<16x1xi1> to vector<16x1xi32>
    %99 = arith.sitofp %98 : vector<16x1xi32> to vector<16x1xf32>
    %c3_i32_29 = arith.constant 3 : i32
    %100 = vector.broadcast %c3_i32_29 : i32 to vector<1x16xi32>
    %101 = arith.andi %9, %100 : vector<1x16xi32>
    %c0_i32_30 = arith.constant 0 : i32
    %102 = vector.broadcast %c0_i32_30 : i32 to vector<1x16xi32>
    %103 = arith.cmpi eq, %101, %102 : vector<1x16xi32>
    %104 = arith.extui %103 : vector<1x16xi1> to vector<1x16xi32>
    %105 = arith.sitofp %104 : vector<1x16xi32> to vector<1x16xf32>
    %106 = vector.broadcast %99 : vector<16x1xf32> to vector<16x16xf32>
    %107 = arith.mulf %5, %106 : vector<16x16xf32>
    %108 = vector.broadcast %105 : vector<1x16xf32> to vector<16x16xf32>
    %109 = arith.mulf %107, %108 : vector<16x16xf32>
    %110 = vector.shape_cast %109 : vector<16x16xf32> to vector<1x16x16xf32>
    %cst_31 = arith.constant dense<0.000000e+00> : vector<1xf32>
    %111 = vector.multi_reduction <add>, %110, %cst_31 [1, 2] : vector<1x16x16xf32> to vector<1xf32>
    %112 = vector.shape_cast %111 : vector<1xf32> to vector<1x1x1xf32>
    %113 = vector.extract %112[0, 0, 0] : f32 from vector<1x1x1xf32>
    %114 = vector.extract_strided_slice %7 {offsets = [0, 4], sizes = [16, 12], strides = [1, 1]} : vector<16x16xf32> to vector<16x12xf32>
    %115 = vector.extract_strided_slice %7 {offsets = [0, 0], sizes = [16, 12], strides = [1, 1]} : vector<16x16xf32> to vector<16x12xf32>
    %116 = arith.subf %114, %115 : vector<16x12xf32>
    %117 = math.absf %116 : vector<16x12xf32>
    %118 = vector.extract_strided_slice %109 {offsets = [0, 0], sizes = [16, 12], strides = [1, 1]} : vector<16x16xf32> to vector<16x12xf32>
    %119 = vector.extract_strided_slice %109 {offsets = [0, 4], sizes = [16, 12], strides = [1, 1]} : vector<16x16xf32> to vector<16x12xf32>
    %120 = arith.mulf %118, %119 : vector<16x12xf32>
    %121 = arith.mulf %117, %120 : vector<16x12xf32>
    %122 = vector.shape_cast %121 : vector<16x12xf32> to vector<1x16x12xf32>
    %cst_32 = arith.constant dense<0.000000e+00> : vector<1xf32>
    %123 = vector.multi_reduction <add>, %122, %cst_32 [1, 2] : vector<1x16x12xf32> to vector<1xf32>
    %124 = vector.shape_cast %123 : vector<1xf32> to vector<1x1x1xf32>
    %125 = vector.extract %124[0, 0, 0] : f32 from vector<1x1x1xf32>
    %cst_33 = arith.constant 0.000000e+00 : f32
    %126 = arith.addf %cst_33, %125 : f32
    %127 = vector.extract_strided_slice %7 {offsets = [4, 0], sizes = [12, 16], strides = [1, 1]} : vector<16x16xf32> to vector<12x16xf32>
    %128 = vector.extract_strided_slice %7 {offsets = [0, 0], sizes = [12, 16], strides = [1, 1]} : vector<16x16xf32> to vector<12x16xf32>
    %129 = arith.subf %127, %128 : vector<12x16xf32>
    %130 = math.absf %129 : vector<12x16xf32>
    %131 = vector.extract_strided_slice %109 {offsets = [0, 0], sizes = [12, 16], strides = [1, 1]} : vector<16x16xf32> to vector<12x16xf32>
    %132 = vector.extract_strided_slice %109 {offsets = [4, 0], sizes = [12, 16], strides = [1, 1]} : vector<16x16xf32> to vector<12x16xf32>
    %133 = arith.mulf %131, %132 : vector<12x16xf32>
    %134 = arith.mulf %130, %133 : vector<12x16xf32>
    %135 = vector.shape_cast %134 : vector<12x16xf32> to vector<1x12x16xf32>
    %cst_34 = arith.constant dense<0.000000e+00> : vector<1xf32>
    %136 = vector.multi_reduction <add>, %135, %cst_34 [1, 2] : vector<1x12x16xf32> to vector<1xf32>
    %137 = vector.shape_cast %136 : vector<1xf32> to vector<1x1x1xf32>
    %138 = vector.extract %137[0, 0, 0] : f32 from vector<1x1x1xf32>
    %139 = arith.addf %126, %138 : f32
    %140 = vector.broadcast %139 : f32 to vector<1x1x1xf32>
    %c0_35 = arith.constant 0 : index
    %c0_36 = arith.constant 0 : index
    %c2 = arith.constant 2 : index
    %141 = vector.load %arg4[%c0_35, %c0_36, %c2] : memref<1x1x4xf32, #tpu.memory_space<vmem>>, vector<1x1x1xf32>
    tpu.vector_store %arg4[%c0_35, %c0_36, %c2], %140 {strides = array<i32>} : memref<1x1x4xf32, #tpu.memory_space<vmem>>, vector<1x1x1xf32>,
    %142 = vector.broadcast %113 : f32 to vector<1x1x1xf32>
    %c0_37 = arith.constant 0 : index
    %c0_38 = arith.constant 0 : index
    %c2_39 = arith.constant 2 : index
    %143 = vector.load %arg5[%c0_37, %c0_38, %c2_39] : memref<1x1x4xf32, #tpu.memory_space<vmem>>, vector<1x1x1xf32>
    tpu.vector_store %arg5[%c0_37, %c0_38, %c2_39], %142 {strides = array<i32>} : memref<1x1x4xf32, #tpu.memory_space<vmem>>, vector<1x1x1xf32>,
    %c7_i32 = arith.constant 7 : i32
    %144 = vector.broadcast %c7_i32 : i32 to vector<16x1xi32>
    %145 = arith.andi %8, %144 : vector<16x1xi32>
    %c0_i32_40 = arith.constant 0 : i32
    %146 = vector.broadcast %c0_i32_40 : i32 to vector<16x1xi32>
    %147 = arith.cmpi eq, %145, %146 : vector<16x1xi32>
    %148 = arith.extui %147 : vector<16x1xi1> to vector<16x1xi32>
    %149 = arith.sitofp %148 : vector<16x1xi32> to vector<16x1xf32>
    %c7_i32_41 = arith.constant 7 : i32
    %150 = vector.broadcast %c7_i32_41 : i32 to vector<1x16xi32>
    %151 = arith.andi %9, %150 : vector<1x16xi32>
    %c0_i32_42 = arith.constant 0 : i32
    %152 = vector.broadcast %c0_i32_42 : i32 to vector<1x16xi32>
    %153 = arith.cmpi eq, %151, %152 : vector<1x16xi32>
    %154 = arith.extui %153 : vector<1x16xi1> to vector<1x16xi32>
    %155 = arith.sitofp %154 : vector<1x16xi32> to vector<1x16xf32>
    %156 = vector.broadcast %149 : vector<16x1xf32> to vector<16x16xf32>
    %157 = arith.mulf %5, %156 : vector<16x16xf32>
    %158 = vector.broadcast %155 : vector<1x16xf32> to vector<16x16xf32>
    %159 = arith.mulf %157, %158 : vector<16x16xf32>
    %160 = vector.shape_cast %159 : vector<16x16xf32> to vector<1x16x16xf32>
    %cst_43 = arith.constant dense<0.000000e+00> : vector<1xf32>
    %161 = vector.multi_reduction <add>, %160, %cst_43 [1, 2] : vector<1x16x16xf32> to vector<1xf32>
    %162 = vector.shape_cast %161 : vector<1xf32> to vector<1x1x1xf32>
    %163 = vector.extract %162[0, 0, 0] : f32 from vector<1x1x1xf32>
    %164 = vector.extract_strided_slice %7 {offsets = [0, 8], sizes = [16, 8], strides = [1, 1]} : vector<16x16xf32> to vector<16x8xf32>
    %165 = vector.extract_strided_slice %7 {offsets = [0, 0], sizes = [16, 8], strides = [1, 1]} : vector<16x16xf32> to vector<16x8xf32>
    %166 = arith.subf %164, %165 : vector<16x8xf32>
    %167 = math.absf %166 : vector<16x8xf32>
    %168 = vector.extract_strided_slice %159 {offsets = [0, 0], sizes = [16, 8], strides = [1, 1]} : vector<16x16xf32> to vector<16x8xf32>
    %169 = vector.extract_strided_slice %159 {offsets = [0, 8], sizes = [16, 8], strides = [1, 1]} : vector<16x16xf32> to vector<16x8xf32>
    %170 = arith.mulf %168, %169 : vector<16x8xf32>
    %171 = arith.mulf %167, %170 : vector<16x8xf32>
    %172 = vector.shape_cast %171 : vector<16x8xf32> to vector<1x16x8xf32>
    %cst_44 = arith.constant dense<0.000000e+00> : vector<1xf32>
    %173 = vector.multi_reduction <add>, %172, %cst_44 [1, 2] : vector<1x16x8xf32> to vector<1xf32>
    %174 = vector.shape_cast %173 : vector<1xf32> to vector<1x1x1xf32>
    %175 = vector.extract %174[0, 0, 0] : f32 from vector<1x1x1xf32>
    %cst_45 = arith.constant 0.000000e+00 : f32
    %176 = arith.addf %cst_45, %175 : f32
    %177 = vector.extract_strided_slice %7 {offsets = [8, 0], sizes = [8, 16], strides = [1, 1]} : vector<16x16xf32> to vector<8x16xf32>
    %178 = vector.extract_strided_slice %7 {offsets = [0, 0], sizes = [8, 16], strides = [1, 1]} : vector<16x16xf32> to vector<8x16xf32>
    %179 = arith.subf %177, %178 : vector<8x16xf32>
    %180 = math.absf %179 : vector<8x16xf32>
    %181 = vector.extract_strided_slice %159 {offsets = [0, 0], sizes = [8, 16], strides = [1, 1]} : vector<16x16xf32> to vector<8x16xf32>
    %182 = vector.extract_strided_slice %159 {offsets = [8, 0], sizes = [8, 16], strides = [1, 1]} : vector<16x16xf32> to vector<8x16xf32>
    %183 = arith.mulf %181, %182 : vector<8x16xf32>
    %184 = arith.mulf %180, %183 : vector<8x16xf32>
    %185 = vector.shape_cast %184 : vector<8x16xf32> to vector<1x8x16xf32>
    %cst_46 = arith.constant dense<0.000000e+00> : vector<1xf32>
    %186 = vector.multi_reduction <add>, %185, %cst_46 [1, 2] : vector<1x8x16xf32> to vector<1xf32>
    %187 = vector.shape_cast %186 : vector<1xf32> to vector<1x1x1xf32>
    %188 = vector.extract %187[0, 0, 0] : f32 from vector<1x1x1xf32>
    %189 = arith.addf %176, %188 : f32
    %190 = vector.broadcast %189 : f32 to vector<1x1x1xf32>
    %c0_47 = arith.constant 0 : index
    %c0_48 = arith.constant 0 : index
    %c3 = arith.constant 3 : index
    %191 = vector.load %arg4[%c0_47, %c0_48, %c3] : memref<1x1x4xf32, #tpu.memory_space<vmem>>, vector<1x1x1xf32>
    tpu.vector_store %arg4[%c0_47, %c0_48, %c3], %190 {strides = array<i32>} : memref<1x1x4xf32, #tpu.memory_space<vmem>>, vector<1x1x1xf32>,
    %192 = vector.broadcast %163 : f32 to vector<1x1x1xf32>
    %c0_49 = arith.constant 0 : index
    %c0_50 = arith.constant 0 : index
    %c3_51 = arith.constant 3 : index
    %193 = vector.load %arg5[%c0_49, %c0_50, %c3_51] : memref<1x1x4xf32, #tpu.memory_space<vmem>>, vector<1x1x1xf32>
    tpu.vector_store %arg5[%c0_49, %c0_50, %c3_51], %192 {strides = array<i32>} : memref<1x1x4xf32, #tpu.memory_space<vmem>>, vector<1x1x1xf32>,
    return
  }
  func.func @transform_0(%arg0: i32) -> (i32, i32, i32) {
    %c0_i32 = arith.constant 0 : i32
    %c0_i32_0 = arith.constant 0 : i32
    %c0_i32_1 = arith.constant 0 : i32
    return %arg0, %c0_i32, %c0_i32_0 : i32, i32, i32
  }
  func.func @transform_1(%arg0: i32) -> (i32, i32, i32) {
    %c0_i32 = arith.constant 0 : i32
    %c0_i32_0 = arith.constant 0 : i32
    %c0_i32_1 = arith.constant 0 : i32
    return %arg0, %c0_i32, %c0_i32_0 : i32, i32, i32
  }
  func.func @transform_2(%arg0: i32) -> (i32, i32, i32) {
    %c0_i32 = arith.constant 0 : i32
    %c0_i32_0 = arith.constant 0 : i32
    %c0_i32_1 = arith.constant 0 : i32
    return %arg0, %c0_i32, %c0_i32_0 : i32, i32, i32
  }
  func.func @transform_3(%arg0: i32) -> (i32, i32, i32) {
    %c0_i32 = arith.constant 0 : i32
    %c0_i32_0 = arith.constant 0 : i32
    %c0_i32_1 = arith.constant 0 : i32
    return %arg0, %c0_i32, %c0_i32_0 : i32, i32, i32
  }
  func.func @transform_4(%arg0: i32) -> (i32, i32, i32) {
    %c0_i32 = arith.constant 0 : i32
    %c0_i32_0 = arith.constant 0 : i32
    %c0_i32_1 = arith.constant 0 : i32
    return %arg0, %c0_i32, %c0_i32_0 : i32, i32, i32
  }
}

</mosaic_0001>

<llo_original>
// kernel: tpu_custom_call.1
$region0: #{tpu_custom_call.1}
  #allocation0 [shape = 'u32[]', space=smem, size = 0x4, offset = 0x4, fixed_abs, tag = 'smem constant byte address 0x4 - core index']
  #allocation1 [shape = 'u32[144,128]{1,0:T(1,128)}', space=vmem, size = 0x12000, scoped, tag = 'internal scratch']
  %s0 = inlined_call_operand.hbm [shape: f32[2,16,16], index: 0, kind: input, shape index: {}]
  %s1 = inlined_call_operand.hbm [shape: f32[2,16,16], index: 1, kind: input, shape index: {}]
  %s2 = inlined_call_operand.hbm [shape: f32[2,16,16], index: 2, kind: input, shape index: {}]
  %s3 = inlined_call_operand.hbm [shape: f32[2,1,4], index: 3, kind: output, shape index: {0}]
  %s4 = inlined_call_operand.hbm [shape: f32[2,1,4], index: 4, kind: output, shape index: {1}]
  %5 = xla_tuple %s3, %s4
  %s6 = sld [smem:[#allocation0]]
  $region65: #{tpu_custom_call.1} parent=0
    _
  %s8 = ssub.s32 1, %s6
  %s9 = scalar_select 0, %s8, %s6
  $region1: #{tpu_custom_call.1} parent=0
    #allocation2 [shape = 'u8[16384]{0}', space=vmem, size = 0x4000, scoped, tag = 'input window, operand 0']
    #allocation3 [shape = 's32[2]{0}', space=sflag, size = 0x8, scoped, tag = 'scoped memory for tpu_custom_call.1']
    #allocation4 [shape = 's32[2]{0}', space=sflag, size = 0x8, scoped, tag = 'scoped memory for tpu_custom_call.1']
    #allocation5 [shape = 'u8[16384]{0}', space=vmem, size = 0x4000, scoped, tag = 'input window, operand 1']
    #allocation6 [shape = 's32[2]{0}', space=sflag, size = 0x8, scoped, tag = 'scoped memory for tpu_custom_call.1']
    #allocation7 [shape = 'u8[16384]{0}', space=vmem, size = 0x4000, scoped, tag = 'input window, operand 2']
    #allocation8 [shape = 'u8[1024]{0}', space=vmem, size = 0x400, scoped, tag = 'output window, operand 0']
    #allocation9 [shape = 'u8[1024]{0}', space=vmem, size = 0x400, scoped, tag = 'output window, operand 1']
    #allocation10 [shape = 's32[2]{0}', space=sflag, size = 0x8, scoped, tag = 'scoped memory for tpu_custom_call.1']
    %10 = vsyncpa [#allocation3], 0
    %s11 = scalar_lea.sflag [#allocation3], 1
    %12 = vsyncpa %s11, 0
    %13 = vsyncpa [#allocation6], 0
    %s14 = scalar_lea.sflag [#allocation6], 1
    %15 = vsyncpa %s14, 0
    %16 = vsyncpa [#allocation4], 0
    %s17 = scalar_lea.sflag [#allocation4], 1
    %18 = vsyncpa %s17, 0
    %19 = vsyncpa [#allocation10], 0
    %s20 = scalar_lea.sflag [#allocation10], 1
    %21 = vsyncpa %s20, 0
    loop: start=0, step=1, limit=4
    $region2: #{tpu_custom_call.1} parent=1 // loop_pre_header
      _
    $region3: #{tpu_custom_call.1} parent=1 // loop_header
      %s23 = sphi 0, %s27
      %p24 = scmp.ge.s32.totalorder %s23, 4
      %s33 = sphi 0, %s35
      %s36 = sphi 0, %s33
      %s37 = sphi 0, %s36
      %s53 = sphi 0, %s37
      %s59 = sphi 0, %s61
      %s62 = sphi 0, %s59
      %s63 = sphi 0, %s62
      %s79 = sphi 0, %s63
      %s85 = sphi 0, %s87
      %s88 = sphi 0, %s85
      %s89 = sphi 0, %s88
      %s105 = sphi 0, %s89
      %s111 = sphi 0, %s113
      %s114 = sphi 0, %s111
      %s115 = sphi 0, %s114
      %s131 = sphi 0, %s115
      %s137 = sphi 0, %s139
      %s140 = sphi 0, %s137
      %s141 = sphi 0, %s140
      %s157 = sphi 0, %s141
    $region4: #{tpu_custom_call.1} parent=1 // loop_header_branch
      %26 = sbr.rel (%p24) target = $region8
    $region5: #{tpu_custom_call.1} parent=1 // loop_body
      %s28 = ssub.s32 %s23, 1
      %s29 = ssub.s32 %s23, 2
      %s30 = sadd.s32 %s23, 1
      %s31 = ssub.s32 %s23, %s30
      %p32 = scmp.eq.s32.totalorder %s31, 0
      %s34 = sadd.s32 %s33, 1
      %s35 = scalar_select %p32, %s33, %s34
      %p38 = pneg %p32
      %p39 = scmp.eq.s32.totalorder %s23, 1
      %p40 = por %p38, %p39
      %p41 = scmp.ne.s32.totalorder %s33, %s36
      %p42 = scmp.eq.s32.totalorder %s23, 0
      %p43 = por %p41, %p42
      %p44 = scmp.ne.s32.totalorder %s33, %s36
      %p45 = scmp.eq.s32.totalorder %s28, 1
      %p46 = por %p44, %p45
      %p47 = scmp.ne.s32.totalorder %s36, %s37
      %p48 = scmp.eq.s32.totalorder %s28, 0
      %p49 = por %p47, %p48
      %p50 = scmp.ne.s32.totalorder %s36, %s37
      %p51 = scmp.eq.s32.totalorder %s29, 1
      %p52 = por %p50, %p51
      %p54 = scmp.ne.s32.totalorder %s37, %s53
      %p55 = scmp.eq.s32.totalorder %s29, 0
      %p56 = por %p54, %p55
      %s57 = ssub.s32 %s23, %s30
      %p58 = scmp.eq.s32.totalorder %s57, 0
      %s60 = sadd.s32 %s59, 1
      %s61 = scalar_select %p58, %s59, %s60
      %p64 = pneg %p58
      %p65 = scmp.eq.s32.totalorder %s23, 1
      %p66 = por %p64, %p65
      %p67 = scmp.ne.s32.totalorder %s59, %s62
      %p68 = scmp.eq.s32.totalorder %s23, 0
      %p69 = por %p67, %p68
      %p70 = scmp.ne.s32.totalorder %s59, %s62
      %p71 = scmp.eq.s32.totalorder %s28, 1
      %p72 = por %p70, %p71
      %p73 = scmp.ne.s32.totalorder %s62, %s63
      %p74 = scmp.eq.s32.totalorder %s28, 0
      %p75 = por %p73, %p74
      %p76 = scmp.ne.s32.totalorder %s62, %s63
      %p77 = scmp.eq.s32.totalorder %s29, 1
      %p78 = por %p76, %p77
      %p80 = scmp.ne.s32.totalorder %s63, %s79
      %p81 = scmp.eq.s32.totalorder %s29, 0
      %p82 = por %p80, %p81
      %s83 = ssub.s32 %s23, %s30
      %p84 = scmp.eq.s32.totalorder %s83, 0
      %s86 = sadd.s32 %s85, 1
      %s87 = scalar_select %p84, %s85, %s86
      %p90 = pneg %p84
      %p91 = scmp.eq.s32.totalorder %s23, 1
      %p92 = por %p90, %p91
      %p93 = scmp.ne.s32.totalorder %s85, %s88
      %p94 = scmp.eq.s32.totalorder %s23, 0
      %p95 = por %p93, %p94
      %p96 = scmp.ne.s32.totalorder %s85, %s88
      %p97 = scmp.eq.s32.totalorder %s28, 1
      %p98 = por %p96, %p97
      %p99 = scmp.ne.s32.totalorder %s88, %s89
      %p100 = scmp.eq.s32.totalorder %s28, 0
      %p101 = por %p99, %p100
      %p102 = scmp.ne.s32.totalorder %s88, %s89
      %p103 = scmp.eq.s32.totalorder %s29, 1
      %p104 = por %p102, %p103
      %p106 = scmp.ne.s32.totalorder %s89, %s105
      %p107 = scmp.eq.s32.totalorder %s29, 0
      %p108 = por %p106, %p107
      %s109 = ssub.s32 %s23, %s30
      %p110 = scmp.eq.s32.totalorder %s109, 0
      %s112 = sadd.s32 %s111, 1
      %s113 = scalar_select %p110, %s111, %s112
      %p116 = pneg %p110
      %p117 = scmp.eq.s32.totalorder %s23, 1
      %p118 = por %p116, %p117
      %p119 = scmp.ne.s32.totalorder %s111, %s114
      %p120 = scmp.eq.s32.totalorder %s23, 0
      %p121 = por %p119, %p120
      %p122 = scmp.ne.s32.totalorder %s111, %s114
      %p123 = scmp.eq.s32.totalorder %s28, 1
      %p124 = por %p122, %p123
      %p125 = scmp.ne.s32.totalorder %s114, %s115
      %p126 = scmp.eq.s32.totalorder %s28, 0
      %p127 = por %p125, %p126
      %p128 = scmp.ne.s32.totalorder %s114, %s115
      %p129 = scmp.eq.s32.totalorder %s29, 1
      %p130 = por %p128, %p129
      %p132 = scmp.ne.s32.totalorder %s115, %s131
      %p133 = scmp.eq.s32.totalorder %s29, 0
      %p134 = por %p132, %p133
      %s135 = ssub.s32 %s23, %s30
      %p136 = scmp.eq.s32.totalorder %s135, 0
      %s138 = sadd.s32 %s137, 1
      %s139 = scalar_select %p136, %s137, %s138
      %p142 = pneg %p136
      %p143 = scmp.eq.s32.totalorder %s23, 1
      %p144 = por %p142, %p143
      %p145 = scmp.ne.s32.totalorder %s137, %s140
      %p146 = scmp.eq.s32.totalorder %s23, 0
      %p147 = por %p145, %p146
      %p148 = scmp.ne.s32.totalorder %s137, %s140
      %p149 = scmp.eq.s32.totalorder %s28, 1
      %p150 = por %p148, %p149
      %p151 = scmp.ne.s32.totalorder %s140, %s141
      %p152 = scmp.eq.s32.totalorder %s28, 0
      %p153 = por %p151, %p152
      %p154 = scmp.ne.s32.totalorder %s140, %s141
      %p155 = scmp.eq.s32.totalorder %s29, 1
      %p156 = por %p154, %p155
      %p158 = scmp.ne.s32.totalorder %s141, %s157
      %p159 = scmp.eq.s32.totalorder %s29, 0
      %p160 = por %p158, %p159
      %p161 = scmp.le.s32.totalorder 1, %s23
      %p162 = scmp.lt.s32.totalorder %s23, 3
      %p163 = pnand %p161, %p162
      %p164 = pneg %p163
      // Predicated region
      $region9: #{tpu_custom_call.1} parent=5 // pred_check
        _
      $region10: #{tpu_custom_call.1} parent=5 // pred_check_branch
        %166 = sbr.rel (%p163) target = $region12
      $region11: #{tpu_custom_call.1} parent=5 // pred_region
        %s167 = ssub.s32 %s23, 1
      $region12: #{tpu_custom_call.1} parent=5 // pred_fallthru
        _
      %p168 = scmp.lt.s32.totalorder %s23, 2
      // Predicated region
      $region13: #{tpu_custom_call.1} parent=5 // pred_check
        %p169 = pneg %p168
      $region14: #{tpu_custom_call.1} parent=5 // pred_check_branch
        %171 = sbr.rel (%p169) target = $region16
      $region15: #{tpu_custom_call.1} parent=5 // pred_region
        // Predicated region
        $region17: #{tpu_custom_call.1} parent=15 // pred_check
          %p172 = pneg %p43
        $region18: #{tpu_custom_call.1} parent=15 // pred_check_branch
          %174 = sbr.rel (%p172) target = $region20
        $region19: #{tpu_custom_call.1} parent=15 // pred_region
          %s175 = sand.u32 %s33, 1
          %s176 = scalar_lea.sflag [#allocation3], %s175
          %s177 = sand.u32 %s33, 1
          %s178 = smul.addr %s177, 16
          %s179 = scalar_lea.vmem [#allocation2], %s178
          %s181 = ssub.s32 256, 256
          %182 = vsyncadd %s176, %s181
          %s183 = smul.addr %s23, 2
          %s184 = smul.addr %s183, 128
          %s185 = scalar_lea.hbm %s0, %s184
          %s186 = sshll.u32 %s179, 4
          %s187 = int_to_ptr.vmem [resolvable:$true] %s186
          %192 = dma.hbm_to_vmem [thread:$0]  %s185, 256, %s187, %s176, 128, 128, 8
        $region20: #{tpu_custom_call.1} parent=15 // pred_fallthru
          _
        // Predicated region
        $region21: #{tpu_custom_call.1} parent=15 // pred_check
          %p193 = pneg %p69
        $region22: #{tpu_custom_call.1} parent=15 // pred_check_branch
          %195 = sbr.rel (%p193) target = $region24
        $region23: #{tpu_custom_call.1} parent=15 // pred_region
          %s196 = sand.u32 %s23, 1
          %s197 = scalar_lea.sflag [#allocation6], %s196
          %s198 = sand.u32 %s59, 1
          %s199 = smul.addr %s198, 16
          %s200 = scalar_lea.vmem [#allocation5], %s199
          %s202 = ssub.s32 256, 256
          %203 = vsyncadd %s197, %s202
          %s204 = smul.addr %s23, 2
          %s205 = smul.addr %s204, 128
          %s206 = scalar_lea.hbm %s1, %s205
          %s207 = sshll.u32 %s200, 4
          %s208 = int_to_ptr.vmem [resolvable:$true] %s207
          %213 = dma.hbm_to_vmem [thread:$0]  %s206, 256, %s208, %s197, 128, 128, 8
        $region24: #{tpu_custom_call.1} parent=15 // pred_fallthru
          _
        // Predicated region
        $region25: #{tpu_custom_call.1} parent=15 // pred_check
          %p214 = pneg %p95
        $region26: #{tpu_custom_call.1} parent=15 // pred_check_branch
          %216 = sbr.rel (%p214) target = $region28
        $region27: #{tpu_custom_call.1} parent=15 // pred_region
          %s217 = sand.u32 %s23, 1
          %s218 = scalar_lea.sflag [#allocation6], %s217
          %s219 = sand.u32 %s85, 1
          %s220 = smul.addr %s219, 16
          %s221 = scalar_lea.vmem [#allocation7], %s220
          %s223 = ssub.s32 256, 256
          %224 = vsyncadd %s218, %s223
          %s225 = smul.addr %s23, 2
          %s226 = smul.addr %s225, 128
          %s227 = scalar_lea.hbm %s2, %s226
          %s228 = sshll.u32 %s221, 4
          %s229 = int_to_ptr.vmem [resolvable:$true] %s228
          %234 = dma.hbm_to_vmem [thread:$0]  %s227, 256, %s229, %s218, 128, 128, 8
        $region28: #{tpu_custom_call.1} parent=15 // pred_fallthru
          _
      $region16: #{tpu_custom_call.1} parent=5 // pred_fallthru
        _
      %p235 = scmp.le.s32.totalorder 1, %s23
      %p236 = scmp.lt.s32.totalorder %s23, 3
      %p237 = pnand %p235, %p236
      %p238 = pneg %p237
      // Predicated region
      $region29: #{tpu_custom_call.1} parent=5 // pred_check
        _
      $region30: #{tpu_custom_call.1} parent=5 // pred_check_branch
        %240 = sbr.rel (%p237) target = $region32
      $region31: #{tpu_custom_call.1} parent=5 // pred_region
        %s241 = ssub.s32 %s23, 1
        %s242 = sand.u32 %s36, 1
        %s243 = scalar_lea.sflag [#allocation3], %s242
        %s244 = sand.u32 %s36, 1
        %s245 = smul.addr %s244, 16
        %s246 = scalar_lea.vmem [#allocation2], %s245
        // Predicated region
        $region33: #{tpu_custom_call.1} parent=31 // pred_check
          %p247 = pneg %p49
        $region34: #{tpu_custom_call.1} parent=31 // pred_check_branch
          %249 = sbr.rel (%p247) target = $region36
        $region35: #{tpu_custom_call.1} parent=31 // pred_region
          %250 = dma.done %s243, 256
        $region36: #{tpu_custom_call.1} parent=31 // pred_fallthru
          _
        %s251 = sand.u32 %s28, 1
        %s252 = scalar_lea.sflag [#allocation6], %s251
        %s253 = sand.u32 %s62, 1
        %s254 = smul.addr %s253, 16
        %s255 = scalar_lea.vmem [#allocation5], %s254
        // Predicated region
        $region37: #{tpu_custom_call.1} parent=31 // pred_check
          %p256 = pneg %p75
        $region38: #{tpu_custom_call.1} parent=31 // pred_check_branch
          %258 = sbr.rel (%p256) target = $region40
        $region39: #{tpu_custom_call.1} parent=31 // pred_region
          %259 = dma.done %s252, 256
        $region40: #{tpu_custom_call.1} parent=31 // pred_fallthru
          _
        %s260 = sand.u32 %s28, 1
        %s261 = scalar_lea.sflag [#allocation6], %s260
        %s262 = sand.u32 %s88, 1
        %s263 = smul.addr %s262, 16
        %s264 = scalar_lea.vmem [#allocation7], %s263
        // Predicated region
        $region41: #{tpu_custom_call.1} parent=31 // pred_check
          %p265 = pneg %p101
        $region42: #{tpu_custom_call.1} parent=31 // pred_check_branch
          %267 = sbr.rel (%p265) target = $region44
        $region43: #{tpu_custom_call.1} parent=31 // pred_region
          %268 = dma.done %s261, 256
        $region44: #{tpu_custom_call.1} parent=31 // pred_fallthru
          _
        %s269 = sand.u32 %s36, 1
        %s270 = scalar_lea.sflag [#allocation3], %s269
        %s271 = sand.u32 %s36, 1
        %s272 = smul.addr %s271, 16
        %s273 = scalar_lea.vmem [#allocation2], %s272
        %p274 = pneg %p49
        %p275 = pneg %p46
        %s276 = sand.u32 %s28, 1
        %s277 = scalar_lea.sflag [#allocation6], %s276
        %s278 = sand.u32 %s62, 1
        %s279 = smul.addr %s278, 16
        %s280 = scalar_lea.vmem [#allocation5], %s279
        %p281 = pneg %p75
        %p282 = pneg %p72
        %s283 = sand.u32 %s28, 1
        %s284 = scalar_lea.sflag [#allocation6], %s283
        %s285 = sand.u32 %s88, 1
        %s286 = smul.addr %s285, 16
        %s287 = scalar_lea.vmem [#allocation7], %s286
        %p288 = pneg %p101
        %p289 = pneg %p98
        %p290 = pneg %p127
        %p291 = pneg %p124
        %s292 = sand.u32 %s114, 1
        %s293 = scalar_lea.sflag [#allocation4], %s292
        %s294 = sand.u32 %s114, 1
        %s295 = scalar_lea.vmem [#allocation8], %s294
        %p296 = pneg %p153
        %p297 = pneg %p150
        %s298 = sand.u32 %s140, 1
        %s299 = scalar_lea.sflag [#allocation10], %s298
        %s300 = sand.u32 %s140, 1
        %s301 = scalar_lea.vmem [#allocation9], %s300
        %v302 = vld [vmem:[%s246] sm:$0xff]
        %v303 = vld [vmem:[%s246 + $0x8] sm:$0xff]
        %v304 = vld [vmem:[%s255] sm:$0xff]
        %v305 = vld [vmem:[%s255 + $0x8] sm:$0xff]
        %v306 = vld [vmem:[%s264] sm:$0xff]
        %v307 = vld [vmem:[%s264 + $0x8] sm:$0xff]
        %v308 = vsub.f32 %v302, %v304
        %v309 = vsub.f32 %v303, %v305
        %v310 = vmul.f32 %v306, %v308
        %v311 = vmul.f32 %v307, %v309
        %v312 = vlaneseq
        %v313 = vshrl.u32 %v312, 7
        %v314 = vadd.s32 %v313, 8
        %v315 = vlaneseq
        %v316 = vand.u32 %v315, 127
        %vm317 = vcmask 130048
        %v318 = vsel %vm317, %v306, 0.0
        %v319 = vsel %vm317, %v307, 0.0
        %v320 = vadd.f32 %v318, %v319
        %321 = vadd.xlane.f32.xlu0 %v320
        %v322 = vpop.xlane.xlu0 %321
        %v323 = vrot.slane %v322, 4
        %v324 = vadd.f32 %v322, %v323
        %v325 = vrot.slane %v324, 2
        %v326 = vadd.f32 %v324, %v325
        %v327 = vrot.slane %v326, 1
        %v328 = vadd.f32 %v326, %v327
        %s329 = vtos %v328
        %332 = vrot.lane.b32.xlu0 %v310, 1
        %v333 = vpop.permute.xlu0 %332
        %334 = vrot.lane.b32.xlu0 %v311, 1
        %v335 = vpop.permute.xlu0 %334
        %v338 = vsub.f32 %v310, %v333
        %v339 = vsub.f32 %v311, %v335
        %v340 = vand.u32 2147483647, %v338
        %v341 = vand.u32 2147483647, %v339
        %344 = vrot.lane.b32.xlu0 %v306, 127
        %v345 = vpop.permute.xlu0 %344
        %346 = vrot.lane.b32.xlu0 %v307, 127
        %v347 = vpop.permute.xlu0 %346
        %v350 = vmul.f32 %v306, %v345
        %v351 = vmul.f32 %v307, %v347
        %354 = vrot.lane.b32.xlu0 %v350, 1
        %v355 = vpop.permute.xlu0 %354
        %356 = vrot.lane.b32.xlu0 %v351, 1
        %v357 = vpop.permute.xlu0 %356
        %v360 = vmul.f32 %v340, %v355
        %v361 = vmul.f32 %v341, %v357
        %364 = vrot.lane.b32.xlu0 %v360, 127
        %v365 = vpop.permute.xlu0 %364
        %366 = vrot.lane.b32.xlu0 %v361, 127
        %v367 = vpop.permute.xlu0 %366
        %vm370 = vcmask 121856
        %v371 = vsel %vm370, %v365, 0.0
        %v372 = vsel %vm370, %v367, 0.0
        %v373 = vadd.f32 %v371, %v372
        %374 = vadd.xlane.f32.xlu0 %v373
        %v375 = vpop.xlane.xlu0 %374
        %v376 = vrot.slane %v375, 4
        %v377 = vadd.f32 %v375, %v376
        %v378 = vrot.slane %v377, 2
        %v379 = vadd.f32 %v377, %v378
        %v380 = vrot.slane %v379, 1
        %v381 = vadd.f32 %v379, %v380
        %s382 = vtos %v381
        %s383 = sadd.f32 %s382, 0.0
        %vm384 = vcmask 1040384
        %v385 = vrot.slane %v310, 7
        %v386 = vrot.slane %v311, 7
        %v387 = vsel %vm384, %v385, %v386
        %v390 = vsub.f32 %v310, %v385
        %v391 = vsub.f32 %v311, %v387
        %v392 = vand.u32 2147483647, %v390
        %v393 = vand.u32 2147483647, %v391
        %vm394 = vcmask 1046528
        %v395 = vrot.slane %v306, 1
        %v396 = vrot.slane %v307, 1
        %v397 = vsel %vm394, %v395, %v396
        %v400 = vmul.f32 %v306, %v397
        %v401 = vmul.f32 %v307, %v396
        %v404 = vrot.slane %v400, 7
        %v405 = vrot.slane %v401, 7
        %v406 = vsel %vm384, %v404, %v405
        %v409 = vmul.f32 %v392, %v404
        %v410 = vmul.f32 %v393, %v406
        %v413 = vrot.slane %v409, 1
        %v414 = vrot.slane %v410, 1
        %v415 = vsel %vm394, %v413, %v414
        %v418 = vsel %vm317, %v415, 0.0
        %vm419 = vcmask 129024
        %v420 = vsel %vm419, %v414, 0.0
        %v421 = vadd.f32 %v418, %v420
        %422 = vadd.xlane.f32.xlu0 %v421
        %v423 = vpop.xlane.xlu0 %422
        %v424 = vrot.slane %v423, 4
        %v425 = vadd.f32 %v423, %v424
        %v426 = vrot.slane %v425, 2
        %v427 = vadd.f32 %v425, %v426
        %v428 = vrot.slane %v427, 1
        %v429 = vadd.f32 %v427, %v428
        %s430 = vtos %v429
        %s431 = sadd.f32 %s383, %s430
        %v432 = vstv %s431
        %vm433 = vcmask 0
        %434 = vst.msk [vmem:[%s295] sm:$0x1] %vm433, %v432
        %v435 = vstv %s329
        %436 = vst.msk [vmem:[%s301] sm:$0x1] %vm433, %v435
        %v437 = vand.u32 %v313, 1
        %v438 = vand.u32 %v314, 1
        %vm439 = vcmp.eq.s32.totalorder %v437, 0
        %vm440 = vcmp.eq.s32.totalorder %v438, 0
        %v441 = vsel %vm439, 1, 0
        %v442 = vsel %vm440, 1, 0
        %v443 = vcvt.s32.f32 %v441
        %v444 = vcvt.s32.f32 %v442
        %v445 = vand.u32 %v316, 1
        %vm446 = vcmp.eq.s32.totalorder %v445, 0
        %v447 = vsel %vm446, 1, 0
        %v448 = vcvt.s32.f32 %v447
        %v449 = vmul.f32 %v306, %v443
        %v450 = vmul.f32 %v307, %v444
        %v451 = vmul.f32 %v449, %v448
        %v452 = vmul.f32 %v450, %v448
        %v453 = vsel %vm317, %v451, 0.0
        %v454 = vsel %vm317, %v452, 0.0
        %v455 = vadd.f32 %v453, %v454
        %456 = vadd.xlane.f32.xlu0 %v455
        %v457 = vpop.xlane.xlu0 %456
        %v458 = vrot.slane %v457, 4
        %v459 = vadd.f32 %v457, %v458
        %v460 = vrot.slane %v459, 2
        %v461 = vadd.f32 %v459, %v460
        %v462 = vrot.slane %v461, 1
        %v463 = vadd.f32 %v461, %v462
        %s464 = vtos %v463
        %465 = vrot.lane.b32.xlu0 %v310, 2
        %v466 = vpop.permute.xlu0 %465
        %467 = vrot.lane.b32.xlu0 %v311, 2
        %v468 = vpop.permute.xlu0 %467
        %v471 = vsub.f32 %v310, %v466
        %v472 = vsub.f32 %v311, %v468
        %v473 = vand.u32 2147483647, %v471
        %v474 = vand.u32 2147483647, %v472
        %477 = vrot.lane.b32.xlu0 %v451, 126
        %v478 = vpop.permute.xlu0 %477
        %479 = vrot.lane.b32.xlu0 %v452, 126
        %v480 = vpop.permute.xlu0 %479
        %v483 = vmul.f32 %v451, %v478
        %v484 = vmul.f32 %v452, %v480
        %487 = vrot.lane.b32.xlu0 %v483, 2
        %v488 = vpop.permute.xlu0 %487
        %489 = vrot.lane.b32.xlu0 %v484, 2
        %v490 = vpop.permute.xlu0 %489
        %v493 = vmul.f32 %v473, %v488
        %v494 = vmul.f32 %v474, %v490
        %497 = vrot.lane.b32.xlu0 %v493, 126
        %v498 = vpop.permute.xlu0 %497
        %499 = vrot.lane.b32.xlu0 %v494, 126
        %v500 = vpop.permute.xlu0 %499
        %vm503 = vcmask 113664
        %v504 = vsel %vm503, %v498, 0.0
        %v505 = vsel %vm503, %v500, 0.0
        %v506 = vadd.f32 %v504, %v505
        %507 = vadd.xlane.f32.xlu0 %v506
        %v508 = vpop.xlane.xlu0 %507
        %v509 = vrot.slane %v508, 4
        %v510 = vadd.f32 %v508, %v509
        %v511 = vrot.slane %v510, 2
        %v512 = vadd.f32 %v510, %v511
        %v513 = vrot.slane %v512, 1
        %v514 = vadd.f32 %v512, %v513
        %s515 = vtos %v514
        %s516 = sadd.f32 %s515, 0.0
        %vm517 = vcmask 1041408
        %v518 = vrot.slane %v310, 6
        %v519 = vrot.slane %v311, 6
        %v520 = vsel %vm517, %v518, %v519
        %v523 = vsub.f32 %v310, %v518
        %v524 = vsub.f32 %v311, %v520
        %v525 = vand.u32 2147483647, %v523
        %v526 = vand.u32 2147483647, %v524
        %vm527 = vcmask 1045504
        %v528 = vrot.slane %v451, 2
        %v529 = vrot.slane %v452, 2
        %v530 = vsel %vm527, %v528, %v529
        %v533 = vmul.f32 %v451, %v530
        %v534 = vmul.f32 %v452, %v529
        %v537 = vrot.slane %v533, 6
        %v538 = vrot.slane %v534, 6
        %v539 = vsel %vm517, %v537, %v538
        %v542 = vmul.f32 %v525, %v537
        %v543 = vmul.f32 %v526, %v539
        %v546 = vrot.slane %v542, 2
        %v547 = vrot.slane %v543, 2
        %v548 = vsel %vm527, %v546, %v547
        %v551 = vsel %vm317, %v548, 0.0
        %vm552 = vcmask 128000
        %v553 = vsel %vm552, %v547, 0.0
        %v554 = vadd.f32 %v551, %v553
        %555 = vadd.xlane.f32.xlu0 %v554
        %v556 = vpop.xlane.xlu0 %555
        %v557 = vrot.slane %v556, 4
        %v558 = vadd.f32 %v556, %v557
        %v559 = vrot.slane %v558, 2
        %v560 = vadd.f32 %v558, %v559
        %v561 = vrot.slane %v560, 1
        %v562 = vadd.f32 %v560, %v561
        %s563 = vtos %v562
        %s564 = sadd.f32 %s516, %s563
        %v565 = vstv %s564
        %vm566 = vcmask 8200
        %567 = vst.msk [vmem:[%s295] sm:$0x1] %vm566, %v565
        %v568 = vstv %s464
        %569 = vst.msk [vmem:[%s301] sm:$0x1] %vm566, %v568
        %v570 = vand.u32 %v313, 3
        %v571 = vand.u32 %v314, 3
        %vm572 = vcmp.eq.s32.totalorder %v570, 0
        %vm573 = vcmp.eq.s32.totalorder %v571, 0
        %v574 = vsel %vm572, 1, 0
        %v575 = vsel %vm573, 1, 0
        %v576 = vcvt.s32.f32 %v574
        %v577 = vcvt.s32.f32 %v575
        %v578 = vand.u32 %v316, 3
        %vm579 = vcmp.eq.s32.totalorder %v578, 0
        %v580 = vsel %vm579, 1, 0
        %v581 = vcvt.s32.f32 %v580
        %v582 = vmul.f32 %v306, %v576
        %v583 = vmul.f32 %v307, %v577
        %v584 = vmul.f32 %v582, %v581
        %v585 = vmul.f32 %v583, %v581
        %v586 = vsel %vm317, %v584, 0.0
        %v587 = vsel %vm317, %v585, 0.0
        %v588 = vadd.f32 %v586, %v587
        %589 = vadd.xlane.f32.xlu0 %v588
        %v590 = vpop.xlane.xlu0 %589
        %v591 = vrot.slane %v590, 4
        %v592 = vadd.f32 %v590, %v591
        %v593 = vrot.slane %v592, 2
        %v594 = vadd.f32 %v592, %v593
        %v595 = vrot.slane %v594, 1
        %v596 = vadd.f32 %v594, %v595
        %s597 = vtos %v596
        %598 = vrot.lane.b32.xlu0 %v310, 4
        %v599 = vpop.permute.xlu0 %598
        %600 = vrot.lane.b32.xlu0 %v311, 4
        %v601 = vpop.permute.xlu0 %600
        %v604 = vsub.f32 %v310, %v599
        %v605 = vsub.f32 %v311, %v601
        %v606 = vand.u32 2147483647, %v604
        %v607 = vand.u32 2147483647, %v605
        %610 = vrot.lane.b32.xlu0 %v584, 124
        %v611 = vpop.permute.xlu0 %610
        %612 = vrot.lane.b32.xlu0 %v585, 124
        %v613 = vpop.permute.xlu0 %612
        %v616 = vmul.f32 %v584, %v611
        %v617 = vmul.f32 %v585, %v613
        %620 = vrot.lane.b32.xlu0 %v616, 4
        %v621 = vpop.permute.xlu0 %620
        %622 = vrot.lane.b32.xlu0 %v617, 4
        %v623 = vpop.permute.xlu0 %622
        %v626 = vmul.f32 %v606, %v621
        %v627 = vmul.f32 %v607, %v623
        %630 = vrot.lane.b32.xlu0 %v626, 124
        %v631 = vpop.permute.xlu0 %630
        %632 = vrot.lane.b32.xlu0 %v627, 124
        %v633 = vpop.permute.xlu0 %632
        %vm636 = vcmask 97280
        %v637 = vsel %vm636, %v631, 0.0
        %v638 = vsel %vm636, %v633, 0.0
        %v639 = vadd.f32 %v637, %v638
        %640 = vadd.xlane.f32.xlu0 %v639
        %v641 = vpop.xlane.xlu0 %640
        %v642 = vrot.slane %v641, 4
        %v643 = vadd.f32 %v641, %v642
        %v644 = vrot.slane %v643, 2
        %v645 = vadd.f32 %v643, %v644
        %v646 = vrot.slane %v645, 1
        %v647 = vadd.f32 %v645, %v646
        %s648 = vtos %v647
        %s649 = sadd.f32 %s648, 0.0
        %vm650 = vcmask 1043456
        %v651 = vrot.slane %v310, 4
        %v652 = vrot.slane %v311, 4
        %v653 = vsel %vm650, %v651, %v652
        %v656 = vsub.f32 %v310, %v651
        %v657 = vsub.f32 %v311, %v653
        %v658 = vand.u32 2147483647, %v656
        %v659 = vand.u32 2147483647, %v657
        %v660 = vrot.slane %v584, 4
        %v661 = vrot.slane %v585, 4
        %v662 = vsel %vm650, %v660, %v661
        %v665 = vmul.f32 %v584, %v662
        %v666 = vmul.f32 %v585, %v661
        %v669 = vrot.slane %v665, 4
        %v670 = vrot.slane %v666, 4
        %v671 = vsel %vm650, %v669, %v670
        %v674 = vmul.f32 %v658, %v669
        %v675 = vmul.f32 %v659, %v671
        %v678 = vrot.slane %v674, 4
        %v679 = vrot.slane %v675, 4
        %v680 = vsel %vm650, %v678, %v679
        %v683 = vsel %vm317, %v680, 0.0
        %vm684 = vcmask 125952
        %v685 = vsel %vm684, %v679, 0.0
        %v686 = vadd.f32 %v683, %v685
        %687 = vadd.xlane.f32.xlu0 %v686
        %v688 = vpop.xlane.xlu0 %687
        %v689 = vrot.slane %v688, 4
        %v690 = vadd.f32 %v688, %v689
        %v691 = vrot.slane %v690, 2
        %v692 = vadd.f32 %v690, %v691
        %v693 = vrot.slane %v692, 1
        %v694 = vadd.f32 %v692, %v693
        %s695 = vtos %v694
        %s696 = sadd.f32 %s649, %s695
        %v697 = vstv %s696
        %vm698 = vcmask 16400
        %699 = vst.msk [vmem:[%s295] sm:$0x1] %vm698, %v697
        %v700 = vstv %s597
        %701 = vst.msk [vmem:[%s301] sm:$0x1] %vm698, %v700
        %v702 = vand.u32 %v313, 7
        %v703 = vand.u32 %v314, 7
        %vm704 = vcmp.eq.s32.totalorder %v702, 0
        %vm705 = vcmp.eq.s32.totalorder %v703, 0
        %v706 = vsel %vm704, 1, 0
        %v707 = vsel %vm705, 1, 0
        %v708 = vcvt.s32.f32 %v706
        %v709 = vcvt.s32.f32 %v707
        %v710 = vand.u32 %v316, 7
        %vm711 = vcmp.eq.s32.totalorder %v710, 0
        %v712 = vsel %vm711, 1, 0
        %v713 = vcvt.s32.f32 %v712
        %v714 = vmul.f32 %v306, %v708
        %v715 = vmul.f32 %v307, %v709
        %v716 = vmul.f32 %v714, %v713
        %v717 = vmul.f32 %v715, %v713
        %v718 = vsel %vm317, %v716, 0.0
        %v719 = vsel %vm317, %v717, 0.0
        %v720 = vadd.f32 %v718, %v719
        %721 = vadd.xlane.f32.xlu0 %v720
        %v722 = vpop.xlane.xlu0 %721
        %v723 = vrot.slane %v722, 4
        %v724 = vadd.f32 %v722, %v723
        %v725 = vrot.slane %v724, 2
        %v726 = vadd.f32 %v724, %v725
        %v727 = vrot.slane %v726, 1
        %v728 = vadd.f32 %v726, %v727
        %s729 = vtos %v728
        %730 = vrot.lane.b32.xlu0 %v310, 8
        %v731 = vpop.permute.xlu0 %730
        %732 = vrot.lane.b32.xlu0 %v311, 8
        %v733 = vpop.permute.xlu0 %732
        %v736 = vsub.f32 %v310, %v731
        %v737 = vsub.f32 %v311, %v733
        %v738 = vand.u32 2147483647, %v736
        %v739 = vand.u32 2147483647, %v737
        %742 = vrot.lane.b32.xlu0 %v716, 120
        %v743 = vpop.permute.xlu0 %742
        %744 = vrot.lane.b32.xlu0 %v717, 120
        %v745 = vpop.permute.xlu0 %744
        %v748 = vmul.f32 %v716, %v743
        %v749 = vmul.f32 %v717, %v745
        %752 = vrot.lane.b32.xlu0 %v748, 8
        %v753 = vpop.permute.xlu0 %752
        %754 = vrot.lane.b32.xlu0 %v749, 8
        %v755 = vpop.permute.xlu0 %754
        %v758 = vmul.f32 %v738, %v753
        %v759 = vmul.f32 %v739, %v755
        %762 = vrot.lane.b32.xlu0 %v758, 120
        %v763 = vpop.permute.xlu0 %762
        %764 = vrot.lane.b32.xlu0 %v759, 120
        %v765 = vpop.permute.xlu0 %764
        %vm768 = vcmask 64512
        %v769 = vsel %vm768, %v763, 0.0
        %v770 = vsel %vm768, %v765, 0.0
        %v771 = vadd.f32 %v769, %v770
        %772 = vadd.xlane.f32.xlu0 %v771
        %v773 = vpop.xlane.xlu0 %772
        %v774 = vrot.slane %v773, 4
        %v775 = vadd.f32 %v773, %v774
        %v776 = vrot.slane %v775, 2
        %v777 = vadd.f32 %v775, %v776
        %v778 = vrot.slane %v777, 1
        %v779 = vadd.f32 %v777, %v778
        %s780 = vtos %v779
        %s781 = sadd.f32 %s780, 0.0
        %v782 = vsub.f32 %v311, %v310
        %v783 = vand.u32 2147483647, %v782
        %v784 = vmul.f32 %v716, %v717
        %v785 = vmul.f32 %v783, %v784
        %v786 = vsel %vm317, %v785, 0.0
        %787 = vadd.xlane.f32.xlu0 %v786
        %v788 = vpop.xlane.xlu0 %787
        %v789 = vrot.slane %v788, 4
        %v790 = vadd.f32 %v788, %v789
        %v791 = vrot.slane %v790, 2
        %v792 = vadd.f32 %v790, %v791
        %v793 = vrot.slane %v792, 1
        %v794 = vadd.f32 %v792, %v793
        %s795 = vtos %v794
        %s796 = sadd.f32 %s781, %s795
        %v797 = vstv %s796
        %vm798 = vcmask 24600
        %799 = vst.msk [vmem:[%s295] sm:$0x1] %vm798, %v797
        %v800 = vstv %s729
        %801 = vst.msk [vmem:[%s301] sm:$0x1] %vm798, %v800
        %s802 = sand.u32 %s114, 1
        %s803 = scalar_lea.sflag [#allocation4], %s802
        %s804 = sand.u32 %s114, 1
        %s805 = scalar_lea.vmem [#allocation8], %s804
        %s806 = sand.u32 %s140, 1
        %s807 = scalar_lea.sflag [#allocation10], %s806
        %s808 = sand.u32 %s140, 1
        %s809 = scalar_lea.vmem [#allocation9], %s808
        // Predicated region
        $region45: #{tpu_custom_call.1} parent=31 // pred_check
          %p810 = pneg %p124
        $region46: #{tpu_custom_call.1} parent=31 // pred_check_branch
          %812 = sbr.rel (%p810) target = $region48
        $region47: #{tpu_custom_call.1} parent=31 // pred_region
          %s814 = ssub.s32 16, 16
          %815 = vsyncadd %s803, %s814
          %s816 = smul.addr %s28, 16
          %s817 = scalar_lea.hbm %s3, %s816
          %s819 = sshll.u32 %s805, 4
          %s820 = int_to_ptr.vmem [resolvable:$true] %s819
          %822 = dma.vmem_to_hbm [thread:$0]  %s820, 16, %s817, %s803
        $region48: #{tpu_custom_call.1} parent=31 // pred_fallthru
          _
        // Predicated region
        $region49: #{tpu_custom_call.1} parent=31 // pred_check
          %p823 = pneg %p150
        $region50: #{tpu_custom_call.1} parent=31 // pred_check_branch
          %825 = sbr.rel (%p823) target = $region52
        $region51: #{tpu_custom_call.1} parent=31 // pred_region
          %s827 = ssub.s32 16, 16
          %828 = vsyncadd %s807, %s827
          %s829 = smul.addr %s28, 16
          %s830 = scalar_lea.hbm %s4, %s829
          %s832 = sshll.u32 %s809, 4
          %s833 = int_to_ptr.vmem [resolvable:$true] %s832
          %835 = dma.vmem_to_hbm [thread:$0]  %s833, 16, %s830, %s807
        $region52: #{tpu_custom_call.1} parent=31 // pred_fallthru
          _
      $region32: #{tpu_custom_call.1} parent=5 // pred_fallthru
        _
      %p836 = scmp.le.s32.totalorder 2, %s23
      // Predicated region
      $region53: #{tpu_custom_call.1} parent=5 // pred_check
        %p837 = pneg %p836
      $region54: #{tpu_custom_call.1} parent=5 // pred_check_branch
        %839 = sbr.rel (%p837) target = $region56
      $region55: #{tpu_custom_call.1} parent=5 // pred_region
        %s840 = ssub.s32 %s23, 2
        // Predicated region
        $region57: #{tpu_custom_call.1} parent=55 // pred_check
          %p841 = pneg %p130
        $region58: #{tpu_custom_call.1} parent=55 // pred_check_branch
          %843 = sbr.rel (%p841) target = $region60
        $region59: #{tpu_custom_call.1} parent=55 // pred_region
          %s844 = sand.u32 %s115, 1
          %s845 = scalar_lea.sflag [#allocation4], %s844
          %s846 = sand.u32 %s115, 1
          %s847 = scalar_lea.vmem [#allocation8], %s846
          %848 = dma.done %s845, 16
        $region60: #{tpu_custom_call.1} parent=55 // pred_fallthru
          _
        // Predicated region
        $region61: #{tpu_custom_call.1} parent=55 // pred_check
          %p849 = pneg %p156
        $region62: #{tpu_custom_call.1} parent=55 // pred_check_branch
          %851 = sbr.rel (%p849) target = $region64
        $region63: #{tpu_custom_call.1} parent=55 // pred_region
          %s852 = sand.u32 %s141, 1
          %s853 = scalar_lea.sflag [#allocation10], %s852
          %s854 = sand.u32 %s141, 1
          %s855 = scalar_lea.vmem [#allocation9], %s854
          %856 = dma.done %s853, 16
        $region64: #{tpu_custom_call.1} parent=55 // pred_fallthru
          _
      $region56: #{tpu_custom_call.1} parent=5 // pred_fallthru
        _
    $region6: #{tpu_custom_call.1} parent=1 // loop_footer
      %s27 = sadd.s32 1, %s23
    $region7: #{tpu_custom_call.1} parent=1 // loop_footer_branch
      %22 = sbr.rel target = $region3
    $region8: #{tpu_custom_call.1} parent=1 // loop_exit
      _
    %857 = vsyncpa [#allocation3], 1
    %s858 = scalar_lea.sflag [#allocation3], 1
    %859 = vsyncpa %s858, 1
    %860 = vsyncpa [#allocation6], 1
    %s861 = scalar_lea.sflag [#allocation6], 1
    %862 = vsyncpa %s861, 1
    %863 = vsyncpa [#allocation4], 1
    %s864 = scalar_lea.sflag [#allocation4], 1
    %865 = vsyncpa %s864, 1
    %866 = vsyncpa [#allocation10], 1
    %s867 = scalar_lea.sflag [#allocation10], 1
    %868 = vsyncpa %s867, 1

</llo_original>
